<compile_context>
chip_gen: v5e
topology: v5e:2x2
jax: 0.10.0
libtpu: 0.0.40
codegen_flags: <defaults>
</compile_context>

<pallas_src>
import functools

import jax
import jax.numpy as jnp
from jax.experimental import pallas as pl
from jax.experimental.pallas import tpu as pltpu


# ----------------------------- Fused Pallas kernel ---------------------------


def _fused_attention_kernel(x_ref, wq_ref, wk_ref, wv_ref, wo_ref, b_ref,
                            o_ref, y_acc, m_sc, l_sc, acc_sc, *, kv_tile):
    """Grid = (batch_block, head, kv_tile).

    Per step: project this head's Q (all rows) and K/V (this kv tile only),
    update the online softmax state, and on the last kv step fold the head's
    output straight into the output-projection accumulator.
    """
    h = pl.program_id(1)
    kv = pl.program_id(2)
    n_h = pl.num_programs(1)
    n_kv = pl.num_programs(2)

    Bblk, T, dim = x_ref.shape
    Dh = wq_ref.shape[2]

    # Zero the output-projection accumulator at the first (head, kv) step of
    # each batch block.
    @pl.when(jnp.logical_and(h == 0, kv == 0))
    def _():
        y_acc[...] = jnp.zeros_like(y_acc)

    # Reset per-head online-softmax state at the first kv step of each head.
    @pl.when(kv == 0)
    def _():
        m_sc[...] = jnp.full(m_sc.shape, -jnp.inf, dtype=m_sc.dtype)
        l_sc[...] = jnp.zeros_like(l_sc)
        acc_sc[...] = jnp.zeros_like(acc_sc)

    # ---- Q projection for this head (scale already folded into wq at init).
    # Recomputed per kv step to avoid a lane-sparse (T, Dh) scratch round trip;
    # for Dh << 256 the MXU has slack (EUP exp is the binding slot).
    xq = x_ref[...].reshape(Bblk * T, dim).astype(jnp.bfloat16)
    q = jnp.dot(xq, wq_ref[0], preferred_element_type=jnp.float32)
    q = q.reshape(Bblk, T, Dh).astype(jnp.bfloat16)

    # ---- K/V projection for this kv tile only (O(T) VMEM, no (T, T) block).
    start = pl.multiple_of(kv * kv_tile, kv_tile)
    xkv = x_ref[:, pl.ds(start, kv_tile), :]
    xkv = xkv.reshape(Bblk * kv_tile, dim).astype(jnp.bfloat16)
    k = jnp.dot(xkv, wk_ref[0], preferred_element_type=jnp.float32)
    v = jnp.dot(xkv, wv_ref[0], preferred_element_type=jnp.float32)
    k = k.reshape(Bblk, kv_tile, Dh).astype(jnp.bfloat16)
    v = v.reshape(Bblk, kv_tile, Dh).astype(jnp.bfloat16)

    # ---- scores: contraction over Dh (no transpose), f32 accumulation.
    s = jnp.einsum('bqd,bkd->bqk', q, k,
                   preferred_element_type=jnp.float32)        # (Bblk, T, tk)

    # ---- online softmax update (all f32).
    m_prev = m_sc[...]
    m_new = jnp.maximum(m_prev, jnp.max(s, axis=-1, keepdims=True))
    alpha = jnp.exp(m_prev - m_new)
    p = jnp.exp(s - m_new)
    l_sc[...] = alpha * l_sc[...] + jnp.sum(p, axis=-1, keepdims=True)
    acc_sc[...] = alpha * acc_sc[...] + jnp.einsum(
        'bqk,bkd->bqd', p.astype(jnp.bfloat16), v,
        preferred_element_type=jnp.float32)
    m_sc[...] = m_new

    # ---- finalize this head: normalize and fold into the output projection.
    @pl.when(kv == n_kv - 1)
    def _():
        # Exact reciprocal (approx=False) so attention rows sum to 1.
        o_h = acc_sc[...] * pl.reciprocal(l_sc[...], approx=False)
        o_h = o_h.reshape(Bblk * T, Dh).astype(jnp.bfloat16)
        y_acc[...] += jnp.dot(o_h, wo_ref[0],
                              preferred_element_type=jnp.float32)

    # ---- after the last head: add bias, lane-dense (Bblk*T, dim) store.
    @pl.when(jnp.logical_and(h == n_h - 1, kv == n_kv - 1))
    def _():
        o_ref[...] = (y_acc[...] + b_ref[...]).astype(o_ref.dtype)


# ------------------------------ Wrapper / tiling -------------------------------


def _pick_batch_block(B, T, target_rows=256, max_rows=2048):
    """Largest divisor of B whose row count Bblk*T stays under max_rows."""
    best = 1
    for cand in range(1, B + 1):
        if B % cand:
            continue
        rows = cand * T
        if rows <= max_rows:
            best = cand
        if rows >= target_rows:
            break
    return best


def _pick_kv_tile(T, target=512):
    """kv tile: full T when small, else the largest 128-multiple divisor <= target."""
    if T <= target:
        return T
    for cand in range(target, 127, -1):
        if cand % 128 == 0 and T % cand == 0:
            return cand
    return T


def _vmem_limit_bytes(batch_block, T, dim, Dh, kv_tile):
    R = batch_block * T
    est = 0
    est += 2 * R * dim * 4                 # x block (double-buffered)
    est += 2 * 3 * dim * Dh * 2            # wq / wk / wv blocks (bf16)
    est += 2 * Dh * dim * 2                # wo block (bf16)
    est += 2 * dim * 4                     # bias
    est += 2 * R * dim * 4                 # output block
    est += R * dim * 4                     # y_acc scratch
    est += 2 * batch_block * T * 4         # m, l scratch
    est += batch_block * T * Dh * 4        # per-head acc scratch
    est += batch_block * T * kv_tile * 4   # live score block
    limit = int(max(8 * 1024 * 1024, 4 * est))
    return min(limit, 48 * 1024 * 1024)    # headroom under v7x's 64 MiB VMEM


def fused_attention(x, w_q, w_k, w_v, w_o, b_out, *, num_heads, dim_head,
                    batch_block=None, kv_tile=None):
    B, T, dim = x.shape
    H, Dh = num_heads, dim_head

    if batch_block is None:
        batch_block = _pick_batch_block(B, T)
    assert B % batch_block == 0
    if kv_tile is None:
        kv_tile = _pick_kv_tile(T)
    assert T % kv_tile == 0

    n_bb = B // batch_block
    n_kv = T // kv_tile
    R = batch_block * T

    kernel = functools.partial(_fused_attention_kernel, kv_tile=kv_tile)

    out_flat = pl.pallas_call(
        kernel,
        out_shape=jax.ShapeDtypeStruct((B * T, dim), jnp.float32),
        grid=(n_bb, H, n_kv),
        in_specs=[
            # x: resident across the head and kv axes (block index only on bb).
            pl.BlockSpec((batch_block, T, dim), lambda bb, h, kv: (bb, 0, 0)),
            # per-head projection weights, delivered by index_map (no gathers).
            pl.BlockSpec((1, dim, Dh), lambda bb, h, kv: (h, 0, 0)),   # w_q (scaled)
            pl.BlockSpec((1, dim, Dh), lambda bb, h, kv: (h, 0, 0)),   # w_k
            pl.BlockSpec((1, dim, Dh), lambda bb, h, kv: (h, 0, 0)),   # w_v
            pl.BlockSpec((1, Dh, dim), lambda bb, h, kv: (h, 0, 0)),   # w_out rows
            pl.BlockSpec((1, dim), lambda bb, h, kv: (0, 0)),          # bias
        ],
        out_specs=pl.BlockSpec((R, dim), lambda bb, h, kv: (bb, 0)),
        scratch_shapes=[
            pltpu.VMEM((R, dim), jnp.float32),              # output-proj accumulator
            pltpu.VMEM((batch_block, T, 1), jnp.float32),   # running max m
            pltpu.VMEM((batch_block, T, 1), jnp.float32),   # running denom l
            pltpu.VMEM((batch_block, T, Dh), jnp.float32),  # running weighted V acc
        ],
        compiler_params=pltpu.CompilerParams(
            dimension_semantics=("parallel", "arbitrary", "arbitrary"),
            vmem_limit_bytes=_vmem_limit_bytes(batch_block, T, dim, Dh, kv_tile)),
    )(x, w_q, w_k, w_v, w_o, b_out)

    return out_flat.reshape(B, T, dim)


# ------------------------------ Module wrapper --------------------------------


class AttentionPallas:
    """JAX/Pallas port of the PyTorch `Attention` module (discriminator=False)."""

    def __init__(self, dim, num_heads=4, dim_head=None, key=None):
        self.dim = dim
        self.num_heads = num_heads
        self.dim_head = int(dim / num_heads) if dim_head is None else dim_head
        self.weight_dim = self.num_heads * self.dim_head
        self.scale_factor = dim ** (-0.5)   # matches the reference (dim, not dim_head)

        if key is None:
            key = jax.random.PRNGKey(42)
        k1, k2, k3 = jax.random.split(key, 3)
        # Deterministic synthetic init; torch.nn.Linear stores weight as (out, in).
        w_qkv = 0.02 * jax.random.normal(
            k1, (self.weight_dim * 3, dim), dtype=jnp.float32)
        w_out = 0.02 * jax.random.normal(
            k2, (dim, self.weight_dim), dtype=jnp.float32)
        b_out = 0.02 * jax.random.normal(k3, (dim,), dtype=jnp.float32)

        H, Dh = self.num_heads, self.dim_head
        # einops 'b t (d k h)': output channel c = d*(3*H) + k*H + h.
        # Re-pack ONCE at init into per-(k, head) (in, out_d) matrices.
        w_khd = jnp.transpose(w_qkv.reshape(Dh, 3, H, dim), (1, 2, 3, 0))  # (3,H,dim,Dh)
        wq32, wk32, wv32 = w_khd[0], w_khd[1], w_khd[2]
        wo32 = jnp.transpose(w_out).reshape(H, Dh, dim)                    # (H,Dh,dim)

        # Fold the softmax scale into the Q weight columns (zero runtime cost).
        self.w_q = (wq32 * self.scale_factor).astype(jnp.bfloat16)
        self.w_k = wk32.astype(jnp.bfloat16)
        self.w_v = wv32.astype(jnp.bfloat16)
        self.w_o = wo32.astype(jnp.bfloat16)
        self.b_out = b_out.reshape(1, dim)                                 # f32

        # f32 copies for the pure-JAX reference.
        self._ref_params = (wq32, wk32, wv32, wo32, b_out)

    def __call__(self, x):
        assert x.ndim == 3
        return fused_attention(x, self.w_q, self.w_k, self.w_v, self.w_o,
                               self.b_out, num_heads=self.num_heads,
                               dim_head=self.dim_head)

    def reference(self, x):
        """Pure-JAX f32 reference mirroring the PyTorch forward pass."""
        wq, wk, wv, wo, b = self._ref_params
        q = jnp.einsum('bti,hio->bhto', x, wq)
        k = jnp.einsum('bti,hio->bhto', x, wk)
        v = jnp.einsum('bti,hio->bhto', x, wv)
        s = jnp.einsum('bhqd,bhkd->bhqk', q, k) * self.scale_factor
        p = jax.nn.softmax(s, axis=-1)
        o = jnp.einsum('bhqk,bhkd->bhqd', p, v)
        return jnp.einsum('bhtd,hdo->bto', o, wo) + b


# ----------------------------------- main --------------------------------------

if __name__ == "__main__":
    B, T, DIM, HEADS = 2, 8, 32, 4  # dim_head = 8, weight_dim = 32

    key = jax.random.PRNGKey(0)
    x_key, param_key = jax.random.split(key)
    x = jax.random.normal(x_key, (B, T, DIM), dtype=jnp.float32)

    attn = AttentionPallas(DIM, num_heads=HEADS, key=param_key)
    out = attn(x)
    jax.block_until_ready(out)

    assert out.shape == (B, T, DIM), out.shape
    assert bool(jnp.all(jnp.isfinite(out)))

    # Tolerance check against the pure-JAX f32 reference (bf16 matmul operands).
    ref = attn.reference(x)
    max_err = float(jnp.max(jnp.abs(out - ref)))
    assert max_err < 3e-2, f"max abs err {max_err}"

    print("KERNEL_OK")
</pallas_src>

<mosaic_0001>
module attributes {stable_mosaic.version = 11 : i64} {
  func.func @_fused_attention_kernel(%arg0: i32, %arg1: i32, %arg2: i32, %arg3: memref<2x8x32xf32, #tpu.memory_space<vmem>>, %arg4: memref<1x32x8xbf16, #tpu.memory_space<vmem>>, %arg5: memref<1x32x8xbf16, #tpu.memory_space<vmem>>, %arg6: memref<1x32x8xbf16, #tpu.memory_space<vmem>>, %arg7: memref<1x8x32xbf16, #tpu.memory_space<vmem>>, %arg8: memref<1x32xf32, #tpu.memory_space<vmem>>, %arg9: memref<16x32xf32, #tpu.memory_space<vmem>>, %arg10: memref<16x32xf32, #tpu.memory_space<vmem>>, %arg11: memref<2x8x1xf32, #tpu.memory_space<vmem>>, %arg12: memref<2x8x1xf32, #tpu.memory_space<vmem>>, %arg13: memref<2x8x8xf32, #tpu.memory_space<vmem>>) attributes {dimension_semantics = [#tpu.dimension_semantics<parallel>, #tpu.dimension_semantics<arbitrary>, #tpu.dimension_semantics<arbitrary>], iteration_bounds = array<i64: 1, 4, 1>, scalar_prefetch = 0 : i64, scratch_operands = 4 : i64, tpu.core_type = #tpu.core_type<tc>, window_params = [{transform_indices = @transform_0, window_bounds = array<i64: 2, 8, 32>}, {transform_indices = @transform_1, window_bounds = array<i64: 1, 32, 8>}, {transform_indices = @transform_2, window_bounds = array<i64: 1, 32, 8>}, {transform_indices = @transform_3, window_bounds = array<i64: 1, 32, 8>}, {transform_indices = @transform_4, window_bounds = array<i64: 1, 8, 32>}, {pipeline_mode = #tpu.pipeline_mode<synchronous>, transform_indices = @transform_5, window_bounds = array<i64: 1, 32>}, {transform_indices = @transform_6, window_bounds = array<i64: 16, 32>}]} {
    %c0_i32 = arith.constant 0 : i32
    %0 = arith.cmpi eq, %arg1, %c0_i32 : i32
    %c0_i32_0 = arith.constant 0 : i32
    %1 = arith.cmpi eq, %arg2, %c0_i32_0 : i32
    %2 = arith.andi %0, %1 : i1
    %3 = arith.extui %2 : i1 to i32
    %c0_i32_1 = arith.constant 0 : i32
    %4 = arith.cmpi ne, %3, %c0_i32_1 : i32
    scf.if %4 {
      %cst_45 = arith.constant 0.000000e+00 : f32
      %64 = vector.broadcast %cst_45 : f32 to vector<16x32xf32>
      %c0_46 = arith.constant 0 : index
      %c0_47 = arith.constant 0 : index
      %65 = vector.load %arg10[%c0_46, %c0_47] : memref<16x32xf32, #tpu.memory_space<vmem>>, vector<16x32xf32>
      tpu.vector_store %arg10[%c0_46, %c0_47], %64 {strides = array<i32>} : memref<16x32xf32, #tpu.memory_space<vmem>>, vector<16x32xf32>,
    } else {
    }
    %c0_i32_2 = arith.constant 0 : i32
    %5 = arith.cmpi eq, %arg2, %c0_i32_2 : i32
    %6 = arith.extui %5 : i1 to i32
    %c0_i32_3 = arith.constant 0 : i32
    %7 = arith.cmpi ne, %6, %c0_i32_3 : i32
    scf.if %7 {
      %cst_45 = arith.constant 0xFF800000 : f32
      %64 = vector.broadcast %cst_45 : f32 to vector<2x8x1xf32>
      %c0_46 = arith.constant 0 : index
      %c0_47 = arith.constant 0 : index
      %c0_48 = arith.constant 0 : index
      %65 = vector.load %arg11[%c0_46, %c0_47, %c0_48] : memref<2x8x1xf32, #tpu.memory_space<vmem>>, vector<2x8x1xf32>
      tpu.vector_store %arg11[%c0_46, %c0_47, %c0_48], %64 {strides = array<i32>} : memref<2x8x1xf32, #tpu.memory_space<vmem>>, vector<2x8x1xf32>,
      %cst_49 = arith.constant 0.000000e+00 : f32
      %66 = vector.broadcast %cst_49 : f32 to vector<2x8x1xf32>
      %c0_50 = arith.constant 0 : index
      %c0_51 = arith.constant 0 : index
      %c0_52 = arith.constant 0 : index
      %67 = vector.load %arg12[%c0_50, %c0_51, %c0_52] : memref<2x8x1xf32, #tpu.memory_space<vmem>>, vector<2x8x1xf32>
      tpu.vector_store %arg12[%c0_50, %c0_51, %c0_52], %66 {strides = array<i32>} : memref<2x8x1xf32, #tpu.memory_space<vmem>>, vector<2x8x1xf32>,
      %cst_53 = arith.constant 0.000000e+00 : f32
      %68 = vector.broadcast %cst_53 : f32 to vector<2x8x8xf32>
      %c0_54 = arith.constant 0 : index
      %c0_55 = arith.constant 0 : index
      %c0_56 = arith.constant 0 : index
      %69 = vector.load %arg13[%c0_54, %c0_55, %c0_56] : memref<2x8x8xf32, #tpu.memory_space<vmem>>, vector<2x8x8xf32>
      tpu.vector_store %arg13[%c0_54, %c0_55, %c0_56], %68 {strides = array<i32>} : memref<2x8x8xf32, #tpu.memory_space<vmem>>, vector<2x8x8xf32>,
    } else {
    }
    %c0 = arith.constant 0 : index
    %c0_4 = arith.constant 0 : index
    %c0_5 = arith.constant 0 : index
    %8 = vector.load %arg3[%c0, %c0_4, %c0_5] : memref<2x8x32xf32, #tpu.memory_space<vmem>>, vector<2x8x32xf32>
    %9 = vector.shape_cast %8 : vector<2x8x32xf32> to vector<16x32xf32>
    %10 = arith.truncf %9 : vector<16x32xf32> to vector<16x32xbf16>
    %c0_6 = arith.constant 0 : index
    %c0_7 = arith.constant 0 : index
    %c0_8 = arith.constant 0 : index
    %11 = vector.load %arg4[%c0_6, %c0_7, %c0_8] : memref<1x32x8xbf16, #tpu.memory_space<vmem>>, vector<1x32x8xbf16>
    %12 = vector.shape_cast %11 : vector<1x32x8xbf16> to vector<32x8xbf16>
    %cst = arith.constant dense<0.000000e+00> : vector<16x8xf32>
    %13 = tpu.matmul %10, %12, %cst {dimension_numbers = #tpu.dot_dimension_numbers<[1], [0], [0], [1], [0, 0, 1, 1], [], []>} : vector<16x32xbf16>, vector<32x8xbf16>, vector<16x8xf32> -> vector<16x8xf32>
    %14 = vector.shape_cast %13 : vector<16x8xf32> to vector<2x8x8xf32>
    %15 = arith.truncf %14 : vector<2x8x8xf32> to vector<2x8x8xbf16>
    %c8_i32 = arith.constant 8 : i32
    %16 = arith.muli %arg2, %c8_i32 : i32
    %17 = tpu.assume_multiple %16, 8 : i32
    %c0_9 = arith.constant 0 : index
    %18 = arith.index_cast %17 : i32 to index
    %c0_10 = arith.constant 0 : index
    %19 = vector.load %arg3[%c0_9, %18, %c0_10] : memref<2x8x32xf32, #tpu.memory_space<vmem>>, vector<2x8x32xf32>
    %20 = vector.shape_cast %19 : vector<2x8x32xf32> to vector<16x32xf32>
    %21 = arith.truncf %20 : vector<16x32xf32> to vector<16x32xbf16>
    %c0_11 = arith.constant 0 : index
    %c0_12 = arith.constant 0 : index
    %c0_13 = arith.constant 0 : index
    %22 = vector.load %arg5[%c0_11, %c0_12, %c0_13] : memref<1x32x8xbf16, #tpu.memory_space<vmem>>, vector<1x32x8xbf16>
    %23 = vector.shape_cast %22 : vector<1x32x8xbf16> to vector<32x8xbf16>
    %cst_14 = arith.constant dense<0.000000e+00> : vector<16x8xf32>
    %24 = tpu.matmul %21, %23, %cst_14 {dimension_numbers = #tpu.dot_dimension_numbers<[1], [0], [0], [1], [0, 0, 1, 1], [], []>} : vector<16x32xbf16>, vector<32x8xbf16>, vector<16x8xf32> -> vector<16x8xf32>
    %c0_15 = arith.constant 0 : index
    %c0_16 = arith.constant 0 : index
    %c0_17 = arith.constant 0 : index
    %25 = vector.load %arg6[%c0_15, %c0_16, %c0_17] : memref<1x32x8xbf16, #tpu.memory_space<vmem>>, vector<1x32x8xbf16>
    %26 = vector.shape_cast %25 : vector<1x32x8xbf16> to vector<32x8xbf16>
    %cst_18 = arith.constant dense<0.000000e+00> : vector<16x8xf32>
    %27 = tpu.matmul %21, %26, %cst_18 {dimension_numbers = #tpu.dot_dimension_numbers<[1], [0], [0], [1], [0, 0, 1, 1], [], []>} : vector<16x32xbf16>, vector<32x8xbf16>, vector<16x8xf32> -> vector<16x8xf32>
    %28 = vector.shape_cast %24 : vector<16x8xf32> to vector<2x8x8xf32>
    %29 = arith.truncf %28 : vector<2x8x8xf32> to vector<2x8x8xbf16>
    %30 = vector.shape_cast %27 : vector<16x8xf32> to vector<2x8x8xf32>
    %31 = arith.truncf %30 : vector<2x8x8xf32> to vector<2x8x8xbf16>
    "tpu.trace_start"() <{level = 10 : i32, message = "bqd,bkd->bqk"}> : () -> ()
    %cst_19 = arith.constant dense<0.000000e+00> : vector<2x8x8xf32>
    %32 = tpu.matmul %15, %29, %cst_19 {dimension_numbers = #tpu.dot_dimension_numbers<[2], [2], [1], [1], [0, 0, 0, 1, 1, 1], [0], [0]>} : vector<2x8x8xbf16>, vector<2x8x8xbf16>, vector<2x8x8xf32> -> vector<2x8x8xf32>
    "tpu.trace_stop"() : () -> ()
    %c0_20 = arith.constant 0 : index
    %c0_21 = arith.constant 0 : index
    %c0_22 = arith.constant 0 : index
    %33 = vector.load %arg11[%c0_20, %c0_21, %c0_22] : memref<2x8x1xf32, #tpu.memory_space<vmem>>, vector<2x8x1xf32>
    %cst_23 = arith.constant dense<0xFF800000> : vector<2x8xf32>
    %34 = vector.multi_reduction <maximumf>, %32, %cst_23 [2] : vector<2x8x8xf32> to vector<2x8xf32>
    %35 = vector.shape_cast %34 : vector<2x8xf32> to vector<2x8x1xf32>
    %36 = arith.maximumf %33, %35 : vector<2x8x1xf32>
    %37 = arith.subf %33, %36 : vector<2x8x1xf32>
    %38 = math.exp %37 : vector<2x8x1xf32>
    %39 = vector.broadcast %36 : vector<2x8x1xf32> to vector<2x8x8xf32>
    %40 = arith.subf %32, %39 : vector<2x8x8xf32>
    %41 = math.exp %40 : vector<2x8x8xf32>
    %c0_24 = arith.constant 0 : index
    %c0_25 = arith.constant 0 : index
    %c0_26 = arith.constant 0 : index
    %42 = vector.load %arg12[%c0_24, %c0_25, %c0_26] : memref<2x8x1xf32, #tpu.memory_space<vmem>>, vector<2x8x1xf32>
    %43 = arith.mulf %38, %42 : vector<2x8x1xf32>
    %cst_27 = arith.constant dense<0.000000e+00> : vector<2x8xf32>
    %44 = vector.multi_reduction <add>, %41, %cst_27 [2] : vector<2x8x8xf32> to vector<2x8xf32>
    %45 = vector.shape_cast %44 : vector<2x8xf32> to vector<2x8x1xf32>
    %46 = arith.addf %43, %45 : vector<2x8x1xf32>
    %c0_28 = arith.constant 0 : index
    %c0_29 = arith.constant 0 : index
    %c0_30 = arith.constant 0 : index
    %47 = vector.load %arg12[%c0_28, %c0_29, %c0_30] : memref<2x8x1xf32, #tpu.memory_space<vmem>>, vector<2x8x1xf32>
    tpu.vector_store %arg12[%c0_28, %c0_29, %c0_30], %46 {strides = array<i32>} : memref<2x8x1xf32, #tpu.memory_space<vmem>>, vector<2x8x1xf32>,
    %c0_31 = arith.constant 0 : index
    %c0_32 = arith.constant 0 : index
    %c0_33 = arith.constant 0 : index
    %48 = vector.load %arg13[%c0_31, %c0_32, %c0_33] : memref<2x8x8xf32, #tpu.memory_space<vmem>>, vector<2x8x8xf32>
    %49 = vector.broadcast %38 : vector<2x8x1xf32> to vector<2x8x8xf32>
    %50 = arith.mulf %49, %48 : vector<2x8x8xf32>
    %51 = arith.truncf %41 : vector<2x8x8xf32> to vector<2x8x8xbf16>
    "tpu.trace_start"() <{level = 10 : i32, message = "bqk,bkd->bqd"}> : () -> ()
    %cst_34 = arith.constant dense<0.000000e+00> : vector<2x8x8xf32>
    %52 = tpu.matmul %51, %31, %cst_34 {dimension_numbers = #tpu.dot_dimension_numbers<[2], [1], [1], [2], [0, 0, 0, 1, 1, 2], [0], [0]>} : vector<2x8x8xbf16>, vector<2x8x8xbf16>, vector<2x8x8xf32> -> vector<2x8x8xf32>
    "tpu.trace_stop"() : () -> ()
    %53 = arith.addf %50, %52 : vector<2x8x8xf32>
    %c0_35 = arith.constant 0 : index
    %c0_36 = arith.constant 0 : index
    %c0_37 = arith.constant 0 : index
    %54 = vector.load %arg13[%c0_35, %c0_36, %c0_37] : memref<2x8x8xf32, #tpu.memory_space<vmem>>, vector<2x8x8xf32>
    tpu.vector_store %arg13[%c0_35, %c0_36, %c0_37], %53 {strides = array<i32>} : memref<2x8x8xf32, #tpu.memory_space<vmem>>, vector<2x8x8xf32>,
    %c0_38 = arith.constant 0 : index
    %c0_39 = arith.constant 0 : index
    %c0_40 = arith.constant 0 : index
    %55 = vector.load %arg11[%c0_38, %c0_39, %c0_40] : memref<2x8x1xf32, #tpu.memory_space<vmem>>, vector<2x8x1xf32>
    tpu.vector_store %arg11[%c0_38, %c0_39, %c0_40], %36 {strides = array<i32>} : memref<2x8x1xf32, #tpu.memory_space<vmem>>, vector<2x8x1xf32>,
    %c0_i32_41 = arith.constant 0 : i32
    %56 = arith.cmpi eq, %arg2, %c0_i32_41 : i32
    %57 = arith.extui %56 : i1 to i32
    %c0_i32_42 = arith.constant 0 : i32
    %58 = arith.cmpi ne, %57, %c0_i32_42 : i32
    scf.if %58 {
      %c0_45 = arith.constant 0 : index
      %c0_46 = arith.constant 0 : index
      %c0_47 = arith.constant 0 : index
      %64 = vector.load %arg13[%c0_45, %c0_46, %c0_47] : memref<2x8x8xf32, #tpu.memory_space<vmem>>, vector<2x8x8xf32>
      %c0_48 = arith.constant 0 : index
      %c0_49 = arith.constant 0 : index
      %c0_50 = arith.constant 0 : index
      %65 = vector.load %arg12[%c0_48, %c0_49, %c0_50] : memref<2x8x1xf32, #tpu.memory_space<vmem>>, vector<2x8x1xf32>
      %66 = tpu.reciprocal %65 : vector<2x8x1xf32> -> vector<2x8x1xf32>
      %67 = vector.broadcast %66 : vector<2x8x1xf32> to vector<2x8x8xf32>
      %68 = arith.mulf %64, %67 : vector<2x8x8xf32>
      %69 = vector.shape_cast %68 : vector<2x8x8xf32> to vector<16x8xf32>
      %70 = arith.truncf %69 : vector<16x8xf32> to vector<16x8xbf16>
      %c0_51 = arith.constant 0 : index
      %c0_52 = arith.constant 0 : index
      %71 = vector.load %arg10[%c0_51, %c0_52] : memref<16x32xf32, #tpu.memory_space<vmem>>, vector<16x32xf32>
      %c0_53 = arith.constant 0 : index
      %c0_54 = arith.constant 0 : index
      %c0_55 = arith.constant 0 : index
      %72 = vector.load %arg7[%c0_53, %c0_54, %c0_55] : memref<1x8x32xbf16, #tpu.memory_space<vmem>>, vector<1x8x32xbf16>
      %73 = vector.shape_cast %72 : vector<1x8x32xbf16> to vector<8x32xbf16>
      %cst_56 = arith.constant dense<0.000000e+00> : vector<16x32xf32>
      %74 = tpu.matmul %70, %73, %cst_56 {dimension_numbers = #tpu.dot_dimension_numbers<[1], [0], [0], [1], [0, 0, 1, 1], [], []>} : vector<16x8xbf16>, vector<8x32xbf16>, vector<16x32xf32> -> vector<16x32xf32>
      %75 = arith.addf %71, %74 : vector<16x32xf32>
      %c0_57 = arith.constant 0 : index
      %c0_58 = arith.constant 0 : index
      %76 = vector.load %arg10[%c0_57, %c0_58] : memref<16x32xf32, #tpu.memory_space<vmem>>, vector<16x32xf32>
      tpu.vector_store %arg10[%c0_57, %c0_58], %75 {strides = array<i32>} : memref<16x32xf32, #tpu.memory_space<vmem>>, vector<16x32xf32>,
    } else {
    }
    %c3_i32 = arith.constant 3 : i32
    %59 = arith.cmpi eq, %arg1, %c3_i32 : i32
    %c0_i32_43 = arith.constant 0 : i32
    %60 = arith.cmpi eq, %arg2, %c0_i32_43 : i32
    %61 = arith.andi %59, %60 : i1
    %62 = arith.extui %61 : i1 to i32
    %c0_i32_44 = arith.constant 0 : i32
    %63 = arith.cmpi ne, %62, %c0_i32_44 : i32
    scf.if %63 {
      %c0_45 = arith.constant 0 : index
      %c0_46 = arith.constant 0 : index
      %64 = vector.load %arg10[%c0_45, %c0_46] : memref<16x32xf32, #tpu.memory_space<vmem>>, vector<16x32xf32>
      %c0_47 = arith.constant 0 : index
      %c0_48 = arith.constant 0 : index
      %65 = vector.load %arg8[%c0_47, %c0_48] : memref<1x32xf32, #tpu.memory_space<vmem>>, vector<1x32xf32>
      %66 = vector.broadcast %65 : vector<1x32xf32> to vector<16x32xf32>
      %67 = arith.addf %64, %66 : vector<16x32xf32>
      %c0_49 = arith.constant 0 : index
      %c0_50 = arith.constant 0 : index
      %68 = vector.load %arg9[%c0_49, %c0_50] : memref<16x32xf32, #tpu.memory_space<vmem>>, vector<16x32xf32>
      tpu.vector_store %arg9[%c0_49, %c0_50], %67 {strides = array<i32>} : memref<16x32xf32, #tpu.memory_space<vmem>>, vector<16x32xf32>,
    } else {
    }
    return
  }
  func.func @transform_0(%arg0: i32, %arg1: i32, %arg2: i32) -> (i32, i32, i32) {
    %c0_i32 = arith.constant 0 : i32
    %c0_i32_0 = arith.constant 0 : i32
    %c0_i32_1 = arith.constant 0 : i32
    return %arg0, %c0_i32, %c0_i32_0 : i32, i32, i32
  }
  func.func @transform_1(%arg0: i32, %arg1: i32, %arg2: i32) -> (i32, i32, i32) {
    %c0_i32 = arith.constant 0 : i32
    %c0_i32_0 = arith.constant 0 : i32
    %c0_i32_1 = arith.constant 0 : i32
    return %arg1, %c0_i32, %c0_i32_0 : i32, i32, i32
  }
  func.func @transform_2(%arg0: i32, %arg1: i32, %arg2: i32) -> (i32, i32, i32) {
    %c0_i32 = arith.constant 0 : i32
    %c0_i32_0 = arith.constant 0 : i32
    %c0_i32_1 = arith.constant 0 : i32
    return %arg1, %c0_i32, %c0_i32_0 : i32, i32, i32
  }
  func.func @transform_3(%arg0: i32, %arg1: i32, %arg2: i32) -> (i32, i32, i32) {
    %c0_i32 = arith.constant 0 : i32
    %c0_i32_0 = arith.constant 0 : i32
    %c0_i32_1 = arith.constant 0 : i32
    return %arg1, %c0_i32, %c0_i32_0 : i32, i32, i32
  }
  func.func @transform_4(%arg0: i32, %arg1: i32, %arg2: i32) -> (i32, i32, i32) {
    %c0_i32 = arith.constant 0 : i32
    %c0_i32_0 = arith.constant 0 : i32
    %c0_i32_1 = arith.constant 0 : i32
    return %arg1, %c0_i32, %c0_i32_0 : i32, i32, i32
  }
  func.func @transform_5(%arg0: i32, %arg1: i32, %arg2: i32) -> (i32, i32) {
    %c0_i32 = arith.constant 0 : i32
    %c0_i32_0 = arith.constant 0 : i32
    %c0_i32_1 = arith.constant 0 : i32
    return %c0_i32, %c0_i32_0 : i32, i32
  }
  func.func @transform_6(%arg0: i32, %arg1: i32, %arg2: i32) -> (i32, i32) {
    %c0_i32 = arith.constant 0 : i32
    %c0_i32_0 = arith.constant 0 : i32
    return %arg0, %c0_i32 : i32, i32
  }
}

</mosaic_0001>

<llo_original>
// kernel: tpu_custom_call.1
$region0: #{tpu_custom_call.1}
  #allocation0 [shape = 'u32[]', space=smem, size = 0x4, offset = 0x4, fixed_abs, tag = 'smem constant byte address 0x4 - core index']
  #allocation1 [shape = 'u32[72,128]{1,0:T(1,128)}', space=vmem, size = 0x9000, scoped, tag = 'internal scratch']
  #allocation2 [shape = 'f32[16,32]{1,0:T(8,128)}', space=vmem, size = 0x2000, scoped, tag = 'scratch operand']
  #allocation3 [shape = 'f32[2,8,1]{2,1,0:T(8,128)}', space=vmem, size = 0x2000, scoped, tag = 'scratch operand']
  #allocation4 [shape = 'f32[2,8,1]{2,1,0:T(8,128)}', space=vmem, size = 0x2000, scoped, tag = 'scratch operand']
  #allocation5 [shape = 'f32[2,8,8]{2,1,0:T(8,128)}', space=vmem, size = 0x2000, scoped, tag = 'scratch operand']
  %s0 = inlined_call_operand.vmem [shape: f32[2,8,32], index: 0, kind: input, shape index: {}]
  %s1 = inlined_call_operand.vmem [shape: bf16[4,32,8], index: 1, kind: input, shape index: {}]
  %s2 = inlined_call_operand.vmem [shape: bf16[4,32,8], index: 2, kind: input, shape index: {}]
  %s3 = inlined_call_operand.vmem [shape: bf16[4,32,8], index: 3, kind: input, shape index: {}]
  %s4 = inlined_call_operand.vmem [shape: bf16[4,8,32], index: 4, kind: input, shape index: {}]
  %s5 = inlined_call_operand.vmem [shape: f32[1,32], index: 5, kind: input, shape index: {}]
  %s6 = inlined_call_operand.hbm [shape: f32[16,32], index: 6, kind: output, shape index: {}]
  %s7 = sld [smem:[#allocation0]]
  $region73: #{tpu_custom_call.1} parent=0
    _
  %s9 = ssub.s32 1, %s7
  %s10 = scalar_select 0, %s9, %s7
  $region1: #{tpu_custom_call.1} parent=0
    #allocation6 [shape = 'u8[8192]{0}', space=vmem, size = 0x2000, scoped, tag = 'output window, operand 0, single buffered']
    #allocation7 [shape = 's32[2]{0}', space=sflag, size = 0x8, scoped, tag = 'scoped memory for tpu_custom_call.1']
    %11 = vsyncpa [#allocation7], 0
    loop: start=0, step=1, limit=6
    $region2: #{tpu_custom_call.1} parent=1 // loop_pre_header
      _
    $region3: #{tpu_custom_call.1} parent=1 // loop_header
      %s13 = sphi 0, %s17
      %p14 = scmp.ge.s32.totalorder %s13, 6
      %s20 = sphi 0, %s39
      %s21 = sphi 0, %s35
      %s22 = sphi 0, %s31
      %s23 = sphi 0, %s20
      %s24 = sphi 0, %s21
      %s25 = sphi 0, %s22
      %s26 = sphi 0, %s23
      %s27 = sphi 0, %s24
      %s28 = sphi 0, %s25
      %s42 = sphi 0, %s44
      %s45 = sphi 0, %s42
      %s46 = sphi 0, %s45
      %s62 = sphi 0, %s46
      %s68 = sphi 0, %s70
      %s71 = sphi 0, %s68
      %s72 = sphi 0, %s71
      %s88 = sphi 0, %s72
      %s94 = sphi 0, %s96
      %s97 = sphi 0, %s94
      %s98 = sphi 0, %s97
      %s114 = sphi 0, %s98
      %s120 = sphi 0, %s122
      %s123 = sphi 0, %s120
      %s124 = sphi 0, %s123
      %s140 = sphi 0, %s124
      %s146 = sphi 0, %s148
      %s149 = sphi 0, %s146
      %s150 = sphi 0, %s149
      %s166 = sphi 0, %s150
      %s170 = sphi 0, %s170
      %s172 = sphi 0, %s170
      %s173 = sphi 0, %s172
      %s187 = sphi 0, %s173
      %s193 = sphi 0, %s195
      %s196 = sphi 0, %s193
      %s197 = sphi 0, %s196
      %s213 = sphi 0, %s197
    $region4: #{tpu_custom_call.1} parent=1 // loop_header_branch
      %16 = sbr.rel (%p14) target = $region8
    $region5: #{tpu_custom_call.1} parent=1 // loop_body
      %s18 = ssub.s32 %s13, 1
      %s19 = ssub.s32 %s13, 2
      %s29 = sadd.s32 1, %s22
      %p30 = scmp.ge.s32.totalorder %s29, 1
      %s31 = scalar_select %p30, 0, %s29
      %s32 = sadd.s32 1, %s21
      %s33 = scalar_select %p30, %s32, %s21
      %p34 = scmp.ge.s32.totalorder %s33, 4
      %s35 = scalar_select %p34, 0, %s33
      %s36 = sadd.s32 1, %s20
      %s37 = scalar_select %p34, %s36, %s20
      %p38 = scmp.ge.s32.totalorder %s37, 1
      %s39 = scalar_select %p38, 0, %s37
      %s40 = ssub.s32 %s20, %s39
      %p41 = scmp.eq.s32.totalorder %s40, 0
      %s43 = sadd.s32 %s42, 1
      %s44 = scalar_select %p41, %s42, %s43
      %p47 = pneg %p41
      %p48 = scmp.eq.s32.totalorder %s13, 3
      %p49 = por %p47, %p48
      %p50 = scmp.ne.s32.totalorder %s42, %s45
      %p51 = scmp.eq.s32.totalorder %s13, 0
      %p52 = por %p50, %p51
      %p53 = scmp.ne.s32.totalorder %s42, %s45
      %p54 = scmp.eq.s32.totalorder %s18, 3
      %p55 = por %p53, %p54
      %p56 = scmp.ne.s32.totalorder %s45, %s46
      %p57 = scmp.eq.s32.totalorder %s18, 0
      %p58 = por %p56, %p57
      %p59 = scmp.ne.s32.totalorder %s45, %s46
      %p60 = scmp.eq.s32.totalorder %s19, 3
      %p61 = por %p59, %p60
      %p63 = scmp.ne.s32.totalorder %s46, %s62
      %p64 = scmp.eq.s32.totalorder %s19, 0
      %p65 = por %p63, %p64
      %s66 = ssub.s32 %s21, %s35
      %p67 = scmp.eq.s32.totalorder %s66, 0
      %s69 = sadd.s32 %s68, 1
      %s70 = scalar_select %p67, %s68, %s69
      %p73 = pneg %p67
      %p74 = scmp.eq.s32.totalorder %s13, 3
      %p75 = por %p73, %p74
      %p76 = scmp.ne.s32.totalorder %s68, %s71
      %p77 = scmp.eq.s32.totalorder %s13, 0
      %p78 = por %p76, %p77
      %p79 = scmp.ne.s32.totalorder %s68, %s71
      %p80 = scmp.eq.s32.totalorder %s18, 3
      %p81 = por %p79, %p80
      %p82 = scmp.ne.s32.totalorder %s71, %s72
      %p83 = scmp.eq.s32.totalorder %s18, 0
      %p84 = por %p82, %p83
      %p85 = scmp.ne.s32.totalorder %s71, %s72
      %p86 = scmp.eq.s32.totalorder %s19, 3
      %p87 = por %p85, %p86
      %p89 = scmp.ne.s32.totalorder %s72, %s88
      %p90 = scmp.eq.s32.totalorder %s19, 0
      %p91 = por %p89, %p90
      %s92 = ssub.s32 %s21, %s35
      %p93 = scmp.eq.s32.totalorder %s92, 0
      %s95 = sadd.s32 %s94, 1
      %s96 = scalar_select %p93, %s94, %s95
      %p99 = pneg %p93
      %p100 = scmp.eq.s32.totalorder %s13, 3
      %p101 = por %p99, %p100
      %p102 = scmp.ne.s32.totalorder %s94, %s97
      %p103 = scmp.eq.s32.totalorder %s13, 0
      %p104 = por %p102, %p103
      %p105 = scmp.ne.s32.totalorder %s94, %s97
      %p106 = scmp.eq.s32.totalorder %s18, 3
      %p107 = por %p105, %p106
      %p108 = scmp.ne.s32.totalorder %s97, %s98
      %p109 = scmp.eq.s32.totalorder %s18, 0
      %p110 = por %p108, %p109
      %p111 = scmp.ne.s32.totalorder %s97, %s98
      %p112 = scmp.eq.s32.totalorder %s19, 3
      %p113 = por %p111, %p112
      %p115 = scmp.ne.s32.totalorder %s98, %s114
      %p116 = scmp.eq.s32.totalorder %s19, 0
      %p117 = por %p115, %p116
      %s118 = ssub.s32 %s21, %s35
      %p119 = scmp.eq.s32.totalorder %s118, 0
      %s121 = sadd.s32 %s120, 1
      %s122 = scalar_select %p119, %s120, %s121
      %p125 = pneg %p119
      %p126 = scmp.eq.s32.totalorder %s13, 3
      %p127 = por %p125, %p126
      %p128 = scmp.ne.s32.totalorder %s120, %s123
      %p129 = scmp.eq.s32.totalorder %s13, 0
      %p130 = por %p128, %p129
      %p131 = scmp.ne.s32.totalorder %s120, %s123
      %p132 = scmp.eq.s32.totalorder %s18, 3
      %p133 = por %p131, %p132
      %p134 = scmp.ne.s32.totalorder %s123, %s124
      %p135 = scmp.eq.s32.totalorder %s18, 0
      %p136 = por %p134, %p135
      %p137 = scmp.ne.s32.totalorder %s123, %s124
      %p138 = scmp.eq.s32.totalorder %s19, 3
      %p139 = por %p137, %p138
      %p141 = scmp.ne.s32.totalorder %s124, %s140
      %p142 = scmp.eq.s32.totalorder %s19, 0
      %p143 = por %p141, %p142
      %s144 = ssub.s32 %s21, %s35
      %p145 = scmp.eq.s32.totalorder %s144, 0
      %s147 = sadd.s32 %s146, 1
      %s148 = scalar_select %p145, %s146, %s147
      %p151 = pneg %p145
      %p152 = scmp.eq.s32.totalorder %s13, 3
      %p153 = por %p151, %p152
      %p154 = scmp.ne.s32.totalorder %s146, %s149
      %p155 = scmp.eq.s32.totalorder %s13, 0
      %p156 = por %p154, %p155
      %p157 = scmp.ne.s32.totalorder %s146, %s149
      %p158 = scmp.eq.s32.totalorder %s18, 3
      %p159 = por %p157, %p158
      %p160 = scmp.ne.s32.totalorder %s149, %s150
      %p161 = scmp.eq.s32.totalorder %s18, 0
      %p162 = por %p160, %p161
      %p163 = scmp.ne.s32.totalorder %s149, %s150
      %p164 = scmp.eq.s32.totalorder %s19, 3
      %p165 = por %p163, %p164
      %p167 = scmp.ne.s32.totalorder %s150, %s166
      %p168 = scmp.eq.s32.totalorder %s19, 0
      %p169 = por %p167, %p168
      %s171 = sadd.s32 %s170, 1
      %p174 = scmp.eq.s32.totalorder %s13, 3
      %p175 = scmp.ne.s32.totalorder %s170, %s172
      %p176 = scmp.eq.s32.totalorder %s13, 0
      %p177 = por %p175, %p176
      %p178 = scmp.ne.s32.totalorder %s170, %s172
      %p179 = scmp.eq.s32.totalorder %s18, 3
      %p180 = por %p178, %p179
      %p181 = scmp.ne.s32.totalorder %s172, %s173
      %p182 = scmp.eq.s32.totalorder %s18, 0
      %p183 = por %p181, %p182
      %p184 = scmp.ne.s32.totalorder %s172, %s173
      %p185 = scmp.eq.s32.totalorder %s19, 3
      %p186 = por %p184, %p185
      %p188 = scmp.ne.s32.totalorder %s173, %s187
      %p189 = scmp.eq.s32.totalorder %s19, 0
      %p190 = por %p188, %p189
      %s191 = ssub.s32 %s20, %s39
      %p192 = scmp.eq.s32.totalorder %s191, 0
      %s194 = sadd.s32 %s193, 1
      %s195 = scalar_select %p192, %s193, %s194
      %p198 = pneg %p192
      %p199 = scmp.eq.s32.totalorder %s13, 3
      %p200 = por %p198, %p199
      %p201 = scmp.ne.s32.totalorder %s193, %s196
      %p202 = scmp.eq.s32.totalorder %s13, 0
      %p203 = por %p201, %p202
      %p204 = scmp.ne.s32.totalorder %s193, %s196
      %p205 = scmp.eq.s32.totalorder %s18, 3
      %p206 = por %p204, %p205
      %p207 = scmp.ne.s32.totalorder %s196, %s197
      %p208 = scmp.eq.s32.totalorder %s18, 0
      %p209 = por %p207, %p208
      %p210 = scmp.ne.s32.totalorder %s196, %s197
      %p211 = scmp.eq.s32.totalorder %s19, 3
      %p212 = por %p210, %p211
      %p214 = scmp.ne.s32.totalorder %s197, %s213
      %p215 = scmp.eq.s32.totalorder %s19, 0
      %p216 = por %p214, %p215
      %p217 = scmp.le.s32.totalorder 1, %s13
      %p218 = scmp.lt.s32.totalorder %s13, 5
      %p219 = pnand %p217, %p218
      %p220 = pneg %p219
      // Predicated region
      $region9: #{tpu_custom_call.1} parent=5 // pred_check
        _
      $region10: #{tpu_custom_call.1} parent=5 // pred_check_branch
        %222 = sbr.rel (%p219) target = $region12
      $region11: #{tpu_custom_call.1} parent=5 // pred_region
        %s223 = ssub.s32 %s13, 1
        // Predicated region
        $region13: #{tpu_custom_call.1} parent=11 // pred_check
          %p224 = pneg %p58
        $region14: #{tpu_custom_call.1} parent=11 // pred_check_branch
          %226 = sbr.rel (%p224) target = $region16
        $region15: #{tpu_custom_call.1} parent=11 // pred_region
          %s227 = smul.u32 2, %s23
          %p228 = scmp.lt.s32.totalorder %s227, 1
          %s229 = scalar_select %p228, %s227, 1
          %s230 = smul.addr %s229, 8
          %s231 = scalar_lea.vmem %s0, %s230
          %s232 = smul.u32 2, %s23
        $region16: #{tpu_custom_call.1} parent=11 // pred_fallthru
          _
        // Predicated region
        $region17: #{tpu_custom_call.1} parent=11 // pred_check
          %p233 = pneg %p183
        $region18: #{tpu_custom_call.1} parent=11 // pred_check_branch
          %235 = sbr.rel (%p233) target = $region20
        $region19: #{tpu_custom_call.1} parent=11 // pred_region
          _
        $region20: #{tpu_custom_call.1} parent=11 // pred_fallthru
          _
      $region12: #{tpu_custom_call.1} parent=5 // pred_fallthru
        _
      %p236 = scmp.lt.s32.totalorder %s13, 4
      // Predicated region
      $region21: #{tpu_custom_call.1} parent=5 // pred_check
        %p237 = pneg %p236
      $region22: #{tpu_custom_call.1} parent=5 // pred_check_branch
        %239 = sbr.rel (%p237) target = $region24
      $region23: #{tpu_custom_call.1} parent=5 // pred_region
        // Predicated region
        $region25: #{tpu_custom_call.1} parent=23 // pred_check
          %p240 = pneg %p78
        $region26: #{tpu_custom_call.1} parent=23 // pred_check_branch
          %242 = sbr.rel (%p240) target = $region28
        $region27: #{tpu_custom_call.1} parent=23 // pred_region
          %p243 = scmp.lt.s32.totalorder %s21, 3
          %s244 = scalar_select %p243, %s21, 3
          %s245 = smul.addr %s244, 4
          %s246 = smul.addr %s245, 4
          %s247 = scalar_lea.vmem %s1, %s246
        $region28: #{tpu_custom_call.1} parent=23 // pred_fallthru
          _
        // Predicated region
        $region29: #{tpu_custom_call.1} parent=23 // pred_check
          %p248 = pneg %p104
        $region30: #{tpu_custom_call.1} parent=23 // pred_check_branch
          %250 = sbr.rel (%p248) target = $region32
        $region31: #{tpu_custom_call.1} parent=23 // pred_region
          %p251 = scmp.lt.s32.totalorder %s21, 3
          %s252 = scalar_select %p251, %s21, 3
          %s253 = smul.addr %s252, 4
          %s254 = smul.addr %s253, 4
          %s255 = scalar_lea.vmem %s2, %s254
        $region32: #{tpu_custom_call.1} parent=23 // pred_fallthru
          _
        // Predicated region
        $region33: #{tpu_custom_call.1} parent=23 // pred_check
          %p256 = pneg %p130
        $region34: #{tpu_custom_call.1} parent=23 // pred_check_branch
          %258 = sbr.rel (%p256) target = $region36
        $region35: #{tpu_custom_call.1} parent=23 // pred_region
          %p259 = scmp.lt.s32.totalorder %s21, 3
          %s260 = scalar_select %p259, %s21, 3
          %s261 = smul.addr %s260, 4
          %s262 = smul.addr %s261, 4
          %s263 = scalar_lea.vmem %s3, %s262
        $region36: #{tpu_custom_call.1} parent=23 // pred_fallthru
          _
        // Predicated region
        $region37: #{tpu_custom_call.1} parent=23 // pred_check
          %p264 = pneg %p156
        $region38: #{tpu_custom_call.1} parent=23 // pred_check_branch
          %266 = sbr.rel (%p264) target = $region40
        $region39: #{tpu_custom_call.1} parent=23 // pred_region
          %p267 = scmp.lt.s32.totalorder %s21, 3
          %s268 = scalar_select %p267, %s21, 3
          %s269 = smul.addr %s268, 4
          %s270 = scalar_lea.vmem %s4, %s269
        $region40: #{tpu_custom_call.1} parent=23 // pred_fallthru
          _
      $region24: #{tpu_custom_call.1} parent=5 // pred_fallthru
        _
      %p271 = scmp.le.s32.totalorder 1, %s13
      %p272 = scmp.lt.s32.totalorder %s13, 5
      %p273 = pnand %p271, %p272
      %p274 = pneg %p273
      // Predicated region
      $region41: #{tpu_custom_call.1} parent=5 // pred_check
        _
      $region42: #{tpu_custom_call.1} parent=5 // pred_check_branch
        %276 = sbr.rel (%p273) target = $region44
      $region43: #{tpu_custom_call.1} parent=5 // pred_region
        %s277 = ssub.s32 %s13, 1
        %s278 = smul.u32 2, %s23
        %p279 = scmp.lt.s32.totalorder %s278, 1
        %s280 = scalar_select %p279, %s278, 1
        %s281 = smul.addr %s280, 8
        %s282 = scalar_lea.vmem %s0, %s281
        %p283 = pneg %p58
        %p284 = pneg %p55
        %p285 = scmp.lt.s32.totalorder %s24, 3
        %s286 = scalar_select %p285, %s24, 3
        %s287 = smul.addr %s286, 4
        %s288 = smul.addr %s287, 4
        %s289 = scalar_lea.vmem %s1, %s288
        %p290 = pneg %p84
        %p291 = pneg %p81
        %p292 = scmp.lt.s32.totalorder %s24, 3
        %s293 = scalar_select %p292, %s24, 3
        %s294 = smul.addr %s293, 4
        %s295 = smul.addr %s294, 4
        %s296 = scalar_lea.vmem %s2, %s295
        %p297 = pneg %p110
        %p298 = pneg %p107
        %p299 = scmp.lt.s32.totalorder %s24, 3
        %s300 = scalar_select %p299, %s24, 3
        %s301 = smul.addr %s300, 4
        %s302 = smul.addr %s301, 4
        %s303 = scalar_lea.vmem %s3, %s302
        %p304 = pneg %p136
        %p305 = pneg %p133
        %p306 = scmp.lt.s32.totalorder %s24, 3
        %s307 = scalar_select %p306, %s24, 3
        %s308 = smul.addr %s307, 4
        %s309 = scalar_lea.vmem %s4, %s308
        %p310 = pneg %p162
        %p311 = pneg %p159
        %p312 = pneg %p183
        %p313 = pneg %p180
        %p314 = pneg %p209
        %p315 = pneg %p206
        %s316 = smul.u32 2, %s23
        %p317 = scmp.lt.s32.totalorder %s316, 1
        %s318 = scalar_select %p317, %s316, 1
        %s319 = smul.addr %s318, 8
        %s320 = scalar_lea.vmem %s0, %s319
        %s321 = smul.u32 2, %s23
        %p322 = scmp.lt.s32.totalorder %s24, 3
        %s323 = scalar_select %p322, %s24, 3
        %s324 = smul.addr %s323, 4
        %s325 = smul.addr %s324, 4
        %s326 = scalar_lea.vmem %s1, %s325
        %p327 = scmp.lt.s32.totalorder %s24, 3
        %s328 = scalar_select %p327, %s24, 3
        %s329 = smul.addr %s328, 4
        %s330 = smul.addr %s329, 4
        %s331 = scalar_lea.vmem %s2, %s330
        %p332 = scmp.lt.s32.totalorder %s24, 3
        %s333 = scalar_select %p332, %s24, 3
        %s334 = smul.addr %s333, 4
        %s335 = smul.addr %s334, 4
        %s336 = scalar_lea.vmem %s3, %s335
        %p337 = scmp.lt.s32.totalorder %s24, 3
        %s338 = scalar_select %p337, %s24, 3
        %s339 = smul.addr %s338, 4
        %s340 = scalar_lea.vmem %s4, %s339
        %s341 = smul.u32 2, %s23
        %p343 = scmp.eq.s32.totalorder %s24, 0
        %p344 = scmp.eq.s32.totalorder %s25, 0
        %p345 = pnand %p343, %p344
        %p346 = pneg %p345
        // Predicated region
        $region45: #{tpu_custom_call.1} parent=43 // pred_check
          _
        $region46: #{tpu_custom_call.1} parent=43 // pred_check_branch
          %348 = sbr.rel (%p345) target = $region48
        $region47: #{tpu_custom_call.1} parent=43 // pred_region
          %vm349 = vcmask 261120
          %350 = vst.msk [vmem:[#allocation2] sm:$0xff] %vm349, 0.0
          %351 = vst.msk [vmem:[#allocation2 + $0x8] sm:$0xff] %vm349, 0.0
        $region48: #{tpu_custom_call.1} parent=43 // pred_fallthru
          _
        // Predicated region
        $region49: #{tpu_custom_call.1} parent=43 // pred_check
          %p352 = pneg %p344
        $region50: #{tpu_custom_call.1} parent=43 // pred_check_branch
          %354 = sbr.rel (%p352) target = $region52
        $region51: #{tpu_custom_call.1} parent=43 // pred_region
          %vm355 = vcmask 7168
          %356 = vst.msk [vmem:[#allocation3] sm:$0xff] %vm355, -inf
          %357 = vst.msk [vmem:[#allocation3 + $0x8] sm:$0xff] %vm355, -inf
          %358 = vst.msk [vmem:[#allocation4] sm:$0xff] %vm355, 0.0
          %359 = vst.msk [vmem:[#allocation4 + $0x8] sm:$0xff] %vm355, 0.0
          %vm360 = vcmask 64512
          %361 = vst.msk [vmem:[#allocation5] sm:$0xff] %vm360, 0.0
          %362 = vst.msk [vmem:[#allocation5 + $0x8] sm:$0xff] %vm360, 0.0
        $region52: #{tpu_custom_call.1} parent=43 // pred_fallthru
          _
        %v363 = vld [vmem:[%s320] sm:$0xff]
        %v364 = vld [vmem:[%s320 + $0x8] sm:$0xff]
        %v365 = vpack.c.bf16 %v364, %v363
        %v366 = vld [vmem:[%s326] sm:$0xf]
        %v367 = vld [vmem:[%s326 + $0x4] sm:$0xf]
        %v368 = vld [vmem:[%s326 + $0x8] sm:$0xf]
        %v369 = vld [vmem:[%s326 + $0xc] sm:$0xf]
        %v374 = vunpack.c.l.b16 %v366
        %v375 = vunpack.c.l.b16 %v367
        %v376 = vunpack.c.l.b16 %v368
        %v377 = vunpack.c.l.b16 %v369
        %v378 = vpack.c.b16 %v375, %v374
        %v379 = vpack.c.b16 %v377, %v376
        %vm382 = vcmask 261120
        %v384 = vsel %vm382, %v365, 0
        %386 = vmatpush.bf16.msra.mxu0 0
        %387 = vmatpush.bf16.msra.mxu0 0
        %388 = vmatpush.bf16.msra.mxu0 0
        %389 = vmatpush.bf16.msra.mxu0 0
        %390 = vmatpush.bf16.msra.mxu0 0
        %391 = vmatpush.bf16.msra.mxu0 0
        %392 = vmatpush.bf16.msra.mxu0 %v379
        %393 = vmatpush.bf16.msra.mxu0 %v378
        %394 = vmatmul.bf16.gmra.mxu0 %v384
        %v395 = vpop.f32.mrf.mxu0
        %v396 = vadd.f32 0.0, %v395
        %v397 = vpop.f32.mrf.mxu0
        %v398 = vadd.f32 0.0, %v397
        %399 = vdwg.mxu0
        %v400 = vpack.c.bf16 %v396, %v396
        %v401 = vpack.c.bf16 %v398, %v398
        %s402 = smul.u32 %s25, 8
        %s403 = scalar_lea.vmem %s320, %s402
        %v404 = vld [vmem:[%s403] sm:$0xff]
        %v405 = vld [vmem:[%s403 + $0x8] sm:$0xff]
        %v406 = vpack.c.bf16 %v405, %v404
        %v407 = vld [vmem:[%s331] sm:$0xf]
        %v408 = vld [vmem:[%s331 + $0x4] sm:$0xf]
        %v409 = vld [vmem:[%s331 + $0x8] sm:$0xf]
        %v410 = vld [vmem:[%s331 + $0xc] sm:$0xf]
        %v415 = vunpack.c.l.b16 %v407
        %v416 = vunpack.c.l.b16 %v408
        %v417 = vunpack.c.l.b16 %v409
        %v418 = vunpack.c.l.b16 %v410
        %v419 = vpack.c.b16 %v416, %v415
        %v420 = vpack.c.b16 %v418, %v417
        %v424 = vsel %vm382, %v406, 0
        %426 = vmatpush.bf16.msra.mxu0 0
        %427 = vmatpush.bf16.msra.mxu0 0
        %428 = vmatpush.bf16.msra.mxu0 0
        %429 = vmatpush.bf16.msra.mxu0 0
        %430 = vmatpush.bf16.msra.mxu0 0
        %431 = vmatpush.bf16.msra.mxu0 0
        %432 = vmatpush.bf16.msra.mxu0 %v420
        %433 = vmatpush.bf16.msra.mxu0 %v419
        %434 = vmatmul.bf16.gmra.mxu0 %v424
        %v435 = vpop.f32.mrf.mxu0
        %v436 = vadd.f32 0.0, %v435
        %v437 = vpop.f32.mrf.mxu0
        %v438 = vadd.f32 0.0, %v437
        %439 = vdwg.mxu0
        %v440 = vld [vmem:[%s336] sm:$0xf]
        %v441 = vld [vmem:[%s336 + $0x4] sm:$0xf]
        %v442 = vld [vmem:[%s336 + $0x8] sm:$0xf]
        %v443 = vld [vmem:[%s336 + $0xc] sm:$0xf]
        %v448 = vunpack.c.l.b16 %v440
        %v449 = vunpack.c.l.b16 %v441
        %v450 = vunpack.c.l.b16 %v442
        %v451 = vunpack.c.l.b16 %v443
        %v452 = vpack.c.b16 %v449, %v448
        %v453 = vpack.c.b16 %v451, %v450
        %456 = vmatpush.bf16.msra.mxu0 0
        %457 = vmatpush.bf16.msra.mxu0 0
        %458 = vmatpush.bf16.msra.mxu0 0
        %459 = vmatpush.bf16.msra.mxu0 0
        %460 = vmatpush.bf16.msra.mxu0 0
        %461 = vmatpush.bf16.msra.mxu0 0
        %462 = vmatpush.bf16.msra.mxu0 %v453
        %463 = vmatpush.bf16.msra.mxu0 %v452
        %464 = vmatmul.bf16.gmra.mxu0 %v424
        %v465 = vpop.f32.mrf.mxu0
        %v466 = vadd.f32 0.0, %v465
        %v467 = vpop.f32.mrf.mxu0
        %v468 = vadd.f32 0.0, %v467
        %469 = vdwg.mxu0
        %v470 = vpack.c.bf16 %v436, %v436
        %v471 = vpack.c.bf16 %v438, %v438
        %v472 = vpack.c.bf16 %v466, %v466
        %v473 = vpack.c.bf16 %v468, %v468
        %vm474 = vcmask 64512
        %v476 = vsel %vm474, %v400, 0
        %v479 = vsel %vm474, %v470, 0
        %481 = vmatpush.bf16.xpose.msra.mxu0 0
        %482 = vmatpush.bf16.xpose.msra.mxu0 0
        %483 = vmatpush.bf16.xpose.msra.mxu0 0
        %484 = vmatpush.bf16.xpose.msra.mxu0 0
        %485 = vmatpush.bf16.xpose.msra.mxu0 0
        %486 = vmatpush.bf16.xpose.msra.mxu0 0
        %487 = vmatpush.bf16.xpose.msra.mxu0 0
        %488 = vmatpush.bf16.xpose.msra.mxu0 %v479
        %489 = vmatmul.bf16.gmra.mxu0 %v476
        %v490 = vpop.f32.mrf.mxu0
        %v491 = vadd.f32 0.0, %v490
        %v492 = vpop.f32.mrf.mxu0
        %493 = vdwg.mxu0
        %v495 = vsel %vm474, %v401, 0
        %v498 = vsel %vm474, %v471, 0
        %500 = vmatpush.bf16.xpose.msra.mxu0 0
        %501 = vmatpush.bf16.xpose.msra.mxu0 0
        %502 = vmatpush.bf16.xpose.msra.mxu0 0
        %503 = vmatpush.bf16.xpose.msra.mxu0 0
        %504 = vmatpush.bf16.xpose.msra.mxu0 0
        %505 = vmatpush.bf16.xpose.msra.mxu0 0
        %506 = vmatpush.bf16.xpose.msra.mxu0 0
        %507 = vmatpush.bf16.xpose.msra.mxu0 %v498
        %508 = vmatmul.bf16.gmra.mxu0 %v495
        %v509 = vpop.f32.mrf.mxu0
        %v510 = vadd.f32 0.0, %v509
        %v511 = vpop.f32.mrf.mxu0
        %512 = vdwg.mxu0
        %v513 = vld [vmem:[#allocation3] sm:$0xff]
        %v514 = vld [vmem:[#allocation3 + $0x8] sm:$0xff]
        %v515 = vsel %vm474, %v491, -inf
        %516 = vmax.xlane.f32.xlu0 %v515
        %v517 = vpop.xlane.xlu0 %516
        %v518 = vsel %vm474, %v510, -inf
        %519 = vmax.xlane.f32.xlu0 %v518
        %v520 = vpop.xlane.xlu0 %519
        %v521 = vmax.f32 %v513, %v517
        %v522 = vmax.f32 %v514, %v520
        %v523 = vsub.f32 %v513, %v521
        %v524 = vsub.f32 %v514, %v522
        %v525 = vmul.f32 %v523, 1.442695
        %v526 = vpow.pop %v525
        %v527 = vmul.f32 %v524, 1.442695
        %v528 = vpow.pop %v527
        %530 = vset.pattern.permute.xlu0 0
        %531 = vperm.xlu0 %530, %v521
        %v532 = vpop.permute.xlu0 %531
        %535 = vset.pattern.permute.xlu0 0
        %536 = vperm.xlu0 %535, %v522
        %v537 = vpop.permute.xlu0 %536
        %v539 = vsub.f32 %v491, %v532
        %v540 = vsub.f32 %v510, %v537
        %v541 = vmul.f32 %v539, 1.442695
        %v542 = vpow.pop %v541
        %v543 = vmul.f32 %v540, 1.442695
        %v544 = vpow.pop %v543
        %v545 = vld [vmem:[#allocation4] sm:$0xff]
        %v546 = vld [vmem:[#allocation4 + $0x8] sm:$0xff]
        %v547 = vmul.f32 %v526, %v545
        %v548 = vmul.f32 %v528, %v546
        %v549 = vsel %vm474, %v542, 0.0
        %550 = vadd.xlane.f32.xlu0 %v549
        %v551 = vpop.xlane.xlu0 %550
        %v552 = vsel %vm474, %v544, 0.0
        %553 = vadd.xlane.f32.xlu0 %v552
        %v554 = vpop.xlane.xlu0 %553
        %v555 = vadd.f32 %v547, %v551
        %v556 = vadd.f32 %v548, %v554
        %vm557 = vcmask 7168
        %558 = vst.msk [vmem:[#allocation4] sm:$0xff] %vm557, %v555
        %559 = vst.msk [vmem:[#allocation4 + $0x8] sm:$0xff] %vm557, %v556
        %v560 = vld [vmem:[#allocation5] sm:$0xff]
        %v561 = vld [vmem:[#allocation5 + $0x8] sm:$0xff]
        %563 = vset.pattern.permute.xlu0 0
        %564 = vperm.xlu0 %563, %v526
        %v565 = vpop.permute.xlu0 %564
        %568 = vset.pattern.permute.xlu0 0
        %569 = vperm.xlu0 %568, %v528
        %v570 = vpop.permute.xlu0 %569
        %v572 = vmul.f32 %v565, %v560
        %v573 = vmul.f32 %v570, %v561
        %v574 = vpack.c.bf16 %v542, %v542
        %v575 = vpack.c.bf16 %v544, %v544
        %v577 = vsel %vm474, %v574, 0
        %vm579 = vcmask 1043456
        %v581 = vsel %vm579, %v472, 0
        %583 = vmatpush.bf16.msra.mxu0 0
        %584 = vmatpush.bf16.msra.mxu0 0
        %585 = vmatpush.bf16.msra.mxu0 0
        %586 = vmatpush.bf16.msra.mxu0 0
        %587 = vmatpush.bf16.msra.mxu0 0
        %588 = vmatpush.bf16.msra.mxu0 0
        %589 = vmatpush.bf16.msra.mxu0 0
        %590 = vmatpush.bf16.msra.mxu0 %v581
        %591 = vmatmul.bf16.gmra.mxu0 %v577
        %v592 = vpop.f32.mrf.mxu0
        %v593 = vadd.f32 0.0, %v592
        %v594 = vpop.f32.mrf.mxu0
        %595 = vdwg.mxu0
        %v597 = vsel %vm474, %v575, 0
        %v600 = vsel %vm579, %v473, 0
        %602 = vmatpush.bf16.msra.mxu0 0
        %603 = vmatpush.bf16.msra.mxu0 0
        %604 = vmatpush.bf16.msra.mxu0 0
        %605 = vmatpush.bf16.msra.mxu0 0
        %606 = vmatpush.bf16.msra.mxu0 0
        %607 = vmatpush.bf16.msra.mxu0 0
        %608 = vmatpush.bf16.msra.mxu0 0
        %609 = vmatpush.bf16.msra.mxu0 %v600
        %610 = vmatmul.bf16.gmra.mxu0 %v597
        %v611 = vpop.f32.mrf.mxu0
        %v612 = vadd.f32 0.0, %v611
        %v613 = vpop.f32.mrf.mxu0
        %614 = vdwg.mxu0
        %v615 = vadd.f32 %v572, %v593
        %v616 = vadd.f32 %v573, %v612
        %617 = vst.msk [vmem:[#allocation5] sm:$0xff] %vm474, %v615
        %618 = vst.msk [vmem:[#allocation5 + $0x8] sm:$0xff] %vm474, %v616
        %619 = vst.msk [vmem:[#allocation3] sm:$0xff] %vm557, %v521
        %620 = vst.msk [vmem:[#allocation3 + $0x8] sm:$0xff] %vm557, %v522
        // Predicated region
        $region53: #{tpu_custom_call.1} parent=43 // pred_check
          %p621 = pneg %p344
        $region54: #{tpu_custom_call.1} parent=43 // pred_check_branch
          %623 = sbr.rel (%p621) target = $region56
        $region55: #{tpu_custom_call.1} parent=43 // pred_region
          %v624 = vld [vmem:[#allocation5] sm:$0xff]
          %v625 = vld [vmem:[#allocation5 + $0x8] sm:$0xff]
          %v626 = vld [vmem:[#allocation4] sm:$0xff]
          %v627 = vld [vmem:[#allocation4 + $0x8] sm:$0xff]
          %v628 = vrcp.pop %v626
          %v629 = vmul.f32 %v626, %v628
          %v630 = vsub.f32 1.0, %v629
          %v631 = vmul.f32 %v628, %v630
          %v632 = vadd.f32 %v628, %v631
          %vm633 = vweird.f32 %v626
          %vm634 = vweird.f32 %v628
          %vm635 = vmor %vm633, %vm634
          %v636 = vsel %vm635, %v628, %v632
          %v637 = vand.u32 2147483647, %v626
          %vm638 = vcmp.eq.f32.partialorder %v637, 8.507059e+37
          %v639 = vand.u32 %v626, 2147483648
          %v640 = vor.u32 1.1754944e-38, %v639
          %v641 = vsel %vm638, %v640, %v636
          %v642 = vrcp.pop %v627
          %v643 = vmul.f32 %v627, %v642
          %v644 = vsub.f32 1.0, %v643
          %v645 = vmul.f32 %v642, %v644
          %v646 = vadd.f32 %v642, %v645
          %vm647 = vweird.f32 %v627
          %vm648 = vweird.f32 %v642
          %vm649 = vmor %vm647, %vm648
          %v650 = vsel %vm649, %v642, %v646
          %v651 = vand.u32 2147483647, %v627
          %vm652 = vcmp.eq.f32.partialorder %v651, 8.507059e+37
          %v653 = vand.u32 %v627, 2147483648
          %v654 = vor.u32 1.1754944e-38, %v653
          %v655 = vsel %vm652, %v654, %v650
          %657 = vset.pattern.permute.xlu0 0
          %658 = vperm.xlu0 %657, %v641
          %v659 = vpop.permute.xlu0 %658
          %662 = vset.pattern.permute.xlu0 0
          %663 = vperm.xlu0 %662, %v655
          %v664 = vpop.permute.xlu0 %663
          %v666 = vmul.f32 %v624, %v659
          %v667 = vmul.f32 %v625, %v664
          %v668 = vpack.c.bf16 %v667, %v666
          %v669 = vld [vmem:[#allocation2] sm:$0xff]
          %v670 = vld [vmem:[#allocation2 + $0x8] sm:$0xff]
          %v671 = vld [vmem:[%s340] sm:$0xf]
          %v673 = vsel %vm474, %v668, 0
          %v676 = vsel %vm579, %v671, 0
          %678 = vmatpush.bf16.msra.mxu0 0
          %679 = vmatpush.bf16.msra.mxu0 0
          %680 = vmatpush.bf16.msra.mxu0 0
          %681 = vmatpush.bf16.msra.mxu0 0
          %682 = vmatpush.bf16.msra.mxu0 0
          %683 = vmatpush.bf16.msra.mxu0 0
          %684 = vmatpush.bf16.msra.mxu0 0
          %685 = vmatpush.bf16.msra.mxu0 %v676
          %686 = vmatmul.bf16.gmra.mxu0 %v673
          %v687 = vpop.f32.mrf.mxu0
          %v688 = vadd.f32 0.0, %v687
          %v689 = vpop.f32.mrf.mxu0
          %v690 = vadd.f32 0.0, %v689
          %691 = vdwg.mxu0
          %v692 = vadd.f32 %v669, %v688
          %v693 = vadd.f32 %v670, %v690
          %694 = vst.msk [vmem:[#allocation2] sm:$0xff] %vm382, %v692
          %695 = vst.msk [vmem:[#allocation2 + $0x8] sm:$0xff] %vm382, %v693
        $region56: #{tpu_custom_call.1} parent=43 // pred_fallthru
          _
        %p696 = scmp.eq.s32.totalorder %s24, 3
        %p697 = pnand %p696, %p344
        %p698 = pneg %p697
        // Predicated region
        $region57: #{tpu_custom_call.1} parent=43 // pred_check
          _
        $region58: #{tpu_custom_call.1} parent=43 // pred_check_branch
          %700 = sbr.rel (%p697) target = $region60
        $region59: #{tpu_custom_call.1} parent=43 // pred_region
          %v701 = vld [vmem:[#allocation2] sm:$0xff]
          %v702 = vld [vmem:[#allocation2 + $0x8] sm:$0xff]
          %v703 = vld [vmem:[%s5] sm:$0x1]
          %v705 = vperm.slane %v703, 0
          %v707 = vadd.f32 %v701, %v705
          %v708 = vadd.f32 %v702, %v705
          %709 = vst.msk [vmem:[#allocation6] sm:$0xff] %vm382, %v707
          %710 = vst.msk [vmem:[#allocation6 + $0x8] sm:$0xff] %vm382, %v708
        $region60: #{tpu_custom_call.1} parent=43 // pred_fallthru
          _
        // Predicated region
        $region61: #{tpu_custom_call.1} parent=43 // pred_check
          %p711 = pneg %p206
        $region62: #{tpu_custom_call.1} parent=43 // pred_check_branch
          %713 = sbr.rel (%p711) target = $region64
        $region63: #{tpu_custom_call.1} parent=43 // pred_region
          %s714 = smul.u32 2, %s23
          %716 = vsyncadd [#allocation7], 0
          %s717 = smul.addr %s714, 8
          %s718 = scalar_lea.hbm %s6, %s717
          %s719 = sshll.u32 [#allocation6], 4
          %s720 = int_to_ptr.vmem [resolvable:$true] %s719
          %s721 = sshll.u32 %s718, 4
          %s722 = int_to_ptr.hbm [resolvable:$true] %s721
          %727 = dma.vmem_to_hbm [thread:$0]  %s720, 256, %s722, [#allocation7], 128, 128, 8
        $region64: #{tpu_custom_call.1} parent=43 // pred_fallthru
          _
        // Predicated region
        $region65: #{tpu_custom_call.1} parent=43 // pred_check
          %p728 = pneg %p206
        $region66: #{tpu_custom_call.1} parent=43 // pred_check_branch
          %730 = sbr.rel (%p728) target = $region68
        $region67: #{tpu_custom_call.1} parent=43 // pred_region
          %732 = dma.done [#allocation7], 256
        $region68: #{tpu_custom_call.1} parent=43 // pred_fallthru
          _
      $region44: #{tpu_custom_call.1} parent=5 // pred_fallthru
        _
      %p733 = scmp.le.s32.totalorder 2, %s13
      // Predicated region
      $region69: #{tpu_custom_call.1} parent=5 // pred_check
        %p734 = pneg %p733
      $region70: #{tpu_custom_call.1} parent=5 // pred_check_branch
        %736 = sbr.rel (%p734) target = $region72
      $region71: #{tpu_custom_call.1} parent=5 // pred_region
        %s737 = ssub.s32 %s13, 2
      $region72: #{tpu_custom_call.1} parent=5 // pred_fallthru
        _
    $region6: #{tpu_custom_call.1} parent=1 // loop_footer
      %s17 = sadd.s32 1, %s13
    $region7: #{tpu_custom_call.1} parent=1 // loop_footer_branch
      %12 = sbr.rel target = $region3
    $region8: #{tpu_custom_call.1} parent=1 // loop_exit
      _
    %738 = vsyncpa [#allocation7], 1
    %s739 = scalar_lea.sflag [#allocation7], 1
    %740 = vsyncpa %s739, 1

</llo_original>
